<compile_context>
chip_gen: v6e
topology: v6e:2x2x1
jax: 0.10.0
libtpu: 0.0.40
codegen_flags: <defaults>
</compile_context>

<pallas_src>
import functools
import math

import jax
import jax.numpy as jnp
from jax import lax
from jax.experimental import pallas as pl
from jax.experimental.pallas import tpu as pltpu


def _attn_kernel(q_ref, k_ref, v_ref, slab_ref, *, scale, batch, seq, dv):
    # q_ref: (Q, Q), k_ref: (B*S, Q), v_ref: (B*S, Dv)
    # slab_ref: (Q, B*Dv + B*S)   -- [out_0 | out_1 | ... | attn_0 | attn_1 | ...]
    q = q_ref[...] * scale                                    # fold scale once
    k_all = k_ref[...]                                        # (B*S, Q)
    v_all = v_ref[...]                                        # (B*S, Dv)

    # One fused score matmul: contract last dim of q with last dim of k_all
    # (no explicit transpose materialized).
    s_all = lax.dot_general(
        q, k_all, (((1,), (1,)), ((), ())),
        preferred_element_type=jnp.float32,
    )                                                         # (Q, B*S)

    outs = []
    attns = []
    for b in range(batch):                                    # B is tiny: unroll
        s = s_all[:, b * seq:(b + 1) * seq]                   # (Q, S) static slice

        # Numerically-stable softmax along the last axis.
        m = jnp.max(s, axis=-1, keepdims=True)
        e = jnp.exp(s - m)
        denom = jnp.sum(e, axis=-1, keepdims=True)            # (Q, 1), in [1, S]
        r = pl.reciprocal(denom, approx=True)                 # EUP
        r = r * (2.0 - denom * r)                             # one Newton step
        p = e * r                                             # (Q, S)

        v_b = v_all[b * seq:(b + 1) * seq, :]                 # (S, Dv) static slice
        o = jnp.dot(p, v_b, preferred_element_type=jnp.float32)  # (Q, Dv)

        outs.append(o)
        attns.append(p)

    # Single lane-dense store for everything.
    slab_ref[...] = jnp.concatenate(outs + attns, axis=-1).astype(slab_ref.dtype)


def attention(query, key, value):
    """query: (Q, Q); key: (B, S, Q); value: (B, S, Dv) -> (out, attn)."""
    Q = query.shape[0]
    B, S, Qk = key.shape
    assert Qk == Q, "key last dim must equal query_dim"
    Dv = value.shape[-1]
    scale = 1.0 / math.sqrt(Q)

    # Leading-dim collapse (layout-free) so the kernel sees 2-D operands.
    key2 = key.reshape(B * S, Q)
    val2 = value.reshape(B * S, Dv)

    kernel = functools.partial(_attn_kernel, scale=scale, batch=B, seq=S, dv=Dv)

    slab_cols = B * Dv + B * S
    bytes_accessed = 4 * (Q * Q + B * S * Q + B * S * Dv + Q * slab_cols)
    flops = 2 * Q * Q * (B * S) + 2 * B * Q * S * Dv

    vmem_spec = pl.BlockSpec(memory_space=pltpu.MemorySpace.VMEM)

    slab = pl.pallas_call(
        kernel,
        out_shape=jax.ShapeDtypeStruct((Q, slab_cols), jnp.float32),
        in_specs=[vmem_spec, vmem_spec, vmem_spec],
        out_specs=vmem_spec,
        cost_estimate=pl.CostEstimate(
            flops=flops,
            transcendentals=B * Q * S,
            bytes_accessed=bytes_accessed,
        ),
    )(query, key2, val2)

    # Slice the lane-dense slab back into the module's output layout.
    out = slab[:, : B * Dv].reshape(Q, B, Dv).transpose(1, 0, 2)   # (B, Q, Dv)
    attn = slab[:, B * Dv:].reshape(Q, B, S).transpose(1, 0, 2)    # (B, Q, S)
    return out, attn


def reference(query, key, value):
    inv_scale = math.sqrt(query.shape[0])
    s = jnp.einsum("qd,bsd->bqs", query, key) / inv_scale
    p = jax.nn.softmax(s, axis=-1)
    o = jnp.einsum("bqs,bsd->bqd", p, value)
    return o, p


if __name__ == "__main__":
    # Small shapes consistent with the forward pass.
    B, S, Q, Dv = 2, 16, 32, 32

    k0 = jax.random.PRNGKey(0)
    k_q, k_key, k_val = jax.random.split(k0, 3)

    # Deterministic "parameter" init (torch.rand -> uniform[0,1)).
    query_param = jax.random.uniform(k_q, (Q, Q), dtype=jnp.float32)
    key_in = jax.random.normal(k_key, (B, S, Q), dtype=jnp.float32)
    value_in = jax.random.normal(k_val, (B, S, Dv), dtype=jnp.float32)

    out, attn = attention(query_param, key_in, value_in)
    jax.block_until_ready((out, attn))

    ref_out, ref_attn = reference(query_param, key_in, value_in)
    assert jnp.allclose(out, ref_out, atol=1e-5, rtol=1e-5)
    assert jnp.allclose(attn, ref_attn, atol=1e-5, rtol=1e-5)

    print("KERNEL_OK")
</pallas_src>

<mosaic_0001>
module attributes {stable_mosaic.version = 11 : i64} {
  func.func @_attn_kernel(%arg0: memref<32x32xf32, #tpu.memory_space<vmem>>, %arg1: memref<32x32xf32, #tpu.memory_space<vmem>>, %arg2: memref<32x32xf32, #tpu.memory_space<vmem>>, %arg3: memref<32x96xf32, #tpu.memory_space<vmem>>) attributes {dimension_semantics = [], scalar_prefetch = 0 : i64, scratch_operands = 0 : i64, tpu.core_type = #tpu.core_type<tc>} {
    %c0 = arith.constant 0 : index
    %c0_0 = arith.constant 0 : index
    %0 = vector.load %arg0[%c0, %c0_0] : memref<32x32xf32, #tpu.memory_space<vmem>>, vector<32x32xf32>
    %cst = arith.constant 0.176776692 : f32
    %1 = vector.broadcast %cst : f32 to vector<32x32xf32>
    %2 = arith.mulf %0, %1 : vector<32x32xf32>
    %c0_1 = arith.constant 0 : index
    %c0_2 = arith.constant 0 : index
    %3 = vector.load %arg1[%c0_1, %c0_2] : memref<32x32xf32, #tpu.memory_space<vmem>>, vector<32x32xf32>
    %c0_3 = arith.constant 0 : index
    %c0_4 = arith.constant 0 : index
    %4 = vector.load %arg2[%c0_3, %c0_4] : memref<32x32xf32, #tpu.memory_space<vmem>>, vector<32x32xf32>
    %cst_5 = arith.constant dense<0.000000e+00> : vector<32x32xf32>
    %5 = tpu.matmul %2, %3, %cst_5 {dimension_numbers = #tpu.dot_dimension_numbers<[1], [1], [0], [0], [0, 0, 1, 0], [], []>} : vector<32x32xf32>, vector<32x32xf32>, vector<32x32xf32> -> vector<32x32xf32>
    %6 = vector.extract_strided_slice %5 {offsets = [0, 0], sizes = [32, 16], strides = [1, 1]} : vector<32x32xf32> to vector<32x16xf32>
    %cst_6 = arith.constant dense<0xFF800000> : vector<32xf32>
    %7 = vector.multi_reduction <maximumf>, %6, %cst_6 [1] : vector<32x16xf32> to vector<32xf32>
    %8 = vector.shape_cast %7 : vector<32xf32> to vector<32x1xf32>
    %9 = vector.broadcast %8 : vector<32x1xf32> to vector<32x16xf32>
    %10 = arith.subf %6, %9 : vector<32x16xf32>
    %11 = math.exp %10 : vector<32x16xf32>
    %cst_7 = arith.constant dense<0.000000e+00> : vector<32xf32>
    %12 = vector.multi_reduction <add>, %11, %cst_7 [1] : vector<32x16xf32> to vector<32xf32>
    %13 = vector.shape_cast %12 : vector<32xf32> to vector<32x1xf32>
    %14 = tpu.reciprocal %13 {approx = true} : vector<32x1xf32> -> vector<32x1xf32>
    %15 = arith.mulf %13, %14 : vector<32x1xf32>
    %cst_8 = arith.constant 2.000000e+00 : f32
    %16 = vector.broadcast %cst_8 : f32 to vector<32x1xf32>
    %17 = arith.subf %16, %15 : vector<32x1xf32>
    %18 = arith.mulf %14, %17 : vector<32x1xf32>
    %19 = vector.broadcast %18 : vector<32x1xf32> to vector<32x16xf32>
    %20 = arith.mulf %11, %19 : vector<32x16xf32>
    %21 = vector.extract_strided_slice %4 {offsets = [0, 0], sizes = [16, 32], strides = [1, 1]} : vector<32x32xf32> to vector<16x32xf32>
    %cst_9 = arith.constant dense<0.000000e+00> : vector<32x32xf32>
    %22 = tpu.matmul %20, %21, %cst_9 {dimension_numbers = #tpu.dot_dimension_numbers<[1], [0], [0], [1], [0, 0, 1, 1], [], []>} : vector<32x16xf32>, vector<16x32xf32>, vector<32x32xf32> -> vector<32x32xf32>
    %23 = vector.extract_strided_slice %5 {offsets = [0, 16], sizes = [32, 16], strides = [1, 1]} : vector<32x32xf32> to vector<32x16xf32>
    %cst_10 = arith.constant dense<0xFF800000> : vector<32xf32>
    %24 = vector.multi_reduction <maximumf>, %23, %cst_10 [1] : vector<32x16xf32> to vector<32xf32>
    %25 = vector.shape_cast %24 : vector<32xf32> to vector<32x1xf32>
    %26 = vector.broadcast %25 : vector<32x1xf32> to vector<32x16xf32>
    %27 = arith.subf %23, %26 : vector<32x16xf32>
    %28 = math.exp %27 : vector<32x16xf32>
    %cst_11 = arith.constant dense<0.000000e+00> : vector<32xf32>
    %29 = vector.multi_reduction <add>, %28, %cst_11 [1] : vector<32x16xf32> to vector<32xf32>
    %30 = vector.shape_cast %29 : vector<32xf32> to vector<32x1xf32>
    %31 = tpu.reciprocal %30 {approx = true} : vector<32x1xf32> -> vector<32x1xf32>
    %32 = arith.mulf %30, %31 : vector<32x1xf32>
    %cst_12 = arith.constant 2.000000e+00 : f32
    %33 = vector.broadcast %cst_12 : f32 to vector<32x1xf32>
    %34 = arith.subf %33, %32 : vector<32x1xf32>
    %35 = arith.mulf %31, %34 : vector<32x1xf32>
    %36 = vector.broadcast %35 : vector<32x1xf32> to vector<32x16xf32>
    %37 = arith.mulf %28, %36 : vector<32x16xf32>
    %38 = vector.extract_strided_slice %4 {offsets = [16, 0], sizes = [16, 32], strides = [1, 1]} : vector<32x32xf32> to vector<16x32xf32>
    %cst_13 = arith.constant dense<0.000000e+00> : vector<32x32xf32>
    %39 = tpu.matmul %37, %38, %cst_13 {dimension_numbers = #tpu.dot_dimension_numbers<[1], [0], [0], [1], [0, 0, 1, 1], [], []>} : vector<32x16xf32>, vector<16x32xf32>, vector<32x32xf32> -> vector<32x32xf32>
    %40 = tpu.concatenate %22, %39, %20, %37 in 1 : vector<32x32xf32>, vector<32x32xf32>, vector<32x16xf32>, vector<32x16xf32> -> vector<32x96xf32>
    %c0_14 = arith.constant 0 : index
    %c0_15 = arith.constant 0 : index
    %41 = vector.load %arg3[%c0_14, %c0_15] : memref<32x96xf32, #tpu.memory_space<vmem>>, vector<32x96xf32>
    tpu.vector_store %arg3[%c0_14, %c0_15], %40 {strides = array<i32>} : memref<32x96xf32, #tpu.memory_space<vmem>>, vector<32x96xf32>,
    return
  }
}

</mosaic_0001>

<llo_original>
// kernel: tpu_custom_call.1
$region0: #{tpu_custom_call.1}
  #allocation0 [shape = 'u32[]', space=smem, size = 0x4, offset = 0x4, fixed_abs, tag = 'smem constant byte address 0x4 - core index']
  #allocation1 [shape = 'u32[144,128]{1,0:T(1,128)}', space=vmem, size = 0x12000, scoped, tag = 'internal scratch']
  %s0 = inlined_call_operand.hbm [shape: f32[32,32], index: 0, kind: input, shape index: {}]
  %s1 = inlined_call_operand.hbm [shape: f32[32,32], index: 1, kind: input, shape index: {}]
  %s2 = inlined_call_operand.hbm [shape: f32[32,32], index: 2, kind: input, shape index: {}]
  %s3 = inlined_call_operand.hbm [shape: f32[32,96], index: 3, kind: output, shape index: {}]
  %s4 = sld [smem:[#allocation0]]
  $region34: #{tpu_custom_call.1} parent=0
    _
  %s6 = ssub.s32 1, %s4
  %s7 = scalar_select 0, %s6, %s4
  $region1: #{tpu_custom_call.1} parent=0
    #allocation2 [shape = 'u8[16384]{0}', space=vmem, size = 0x4000, scoped, tag = 'input window, operand 0, single buffered']
    #allocation3 [shape = 's32[1]{0}', space=sflag, size = 0x4, scoped, tag = 'scoped memory for tpu_custom_call.1']
    #allocation4 [shape = 's32[1]{0}', space=sflag, size = 0x4, scoped, tag = 'scoped memory for tpu_custom_call.1']
    #allocation5 [shape = 'u8[16384]{0}', space=vmem, size = 0x4000, scoped, tag = 'input window, operand 1, single buffered']
    #allocation6 [shape = 's32[1]{0}', space=sflag, size = 0x4, scoped, tag = 'scoped memory for tpu_custom_call.1']
    #allocation7 [shape = 'u8[16384]{0}', space=vmem, size = 0x4000, scoped, tag = 'input window, operand 2, single buffered']
    #allocation8 [shape = 'u8[16384]{0}', space=vmem, size = 0x4000, scoped, tag = 'output window, operand 0, single buffered']
    %8 = vsyncpa [#allocation3], 0
    %9 = vsyncpa [#allocation6], 0
    %10 = vsyncpa [#allocation4], 0
    // Predicated region
    $region2: #{tpu_custom_call.1} parent=1 // pred_check
      _
    $region3: #{tpu_custom_call.1} parent=1 // pred_check_branch
      %12 = sbr.rel (0) target = $region5
    $region4: #{tpu_custom_call.1} parent=1 // pred_region
      %s14 = ssub.s32 512, 512
      %15 = vsyncadd [#allocation3], %s14
      %s16 = sshll.u32 [#allocation2], 4
      %s17 = int_to_ptr.vmem [resolvable:$true] %s16
      %22 = dma.hbm_to_vmem [thread:$0]  %s0, 512, %s17, [#allocation3], 128, 128, 8
    $region5: #{tpu_custom_call.1} parent=1 // pred_fallthru
      _
    // Predicated region
    $region6: #{tpu_custom_call.1} parent=1 // pred_check
      _
    $region7: #{tpu_custom_call.1} parent=1 // pred_check_branch
      %24 = sbr.rel (0) target = $region9
    $region8: #{tpu_custom_call.1} parent=1 // pred_region
      %s26 = ssub.s32 512, 512
      %27 = vsyncadd [#allocation6], %s26
      %s28 = sshll.u32 [#allocation5], 4
      %s29 = int_to_ptr.vmem [resolvable:$true] %s28
      %34 = dma.hbm_to_vmem [thread:$0]  %s1, 512, %s29, [#allocation6], 128, 128, 8
    $region9: #{tpu_custom_call.1} parent=1 // pred_fallthru
      _
    // Predicated region
    $region10: #{tpu_custom_call.1} parent=1 // pred_check
      _
    $region11: #{tpu_custom_call.1} parent=1 // pred_check_branch
      %36 = sbr.rel (0) target = $region13
    $region12: #{tpu_custom_call.1} parent=1 // pred_region
      %s38 = ssub.s32 512, 512
      %39 = vsyncadd [#allocation6], %s38
      %s40 = sshll.u32 [#allocation7], 4
      %s41 = int_to_ptr.vmem [resolvable:$true] %s40
      %46 = dma.hbm_to_vmem [thread:$0]  %s2, 512, %s41, [#allocation6], 128, 128, 8
    $region13: #{tpu_custom_call.1} parent=1 // pred_fallthru
      _
    // Predicated region
    $region14: #{tpu_custom_call.1} parent=1 // pred_check
      _
    $region15: #{tpu_custom_call.1} parent=1 // pred_check_branch
      %48 = sbr.rel (0) target = $region17
    $region16: #{tpu_custom_call.1} parent=1 // pred_region
      %49 = dma.done [#allocation3], 512
    $region17: #{tpu_custom_call.1} parent=1 // pred_fallthru
      _
    // Predicated region
    $region18: #{tpu_custom_call.1} parent=1 // pred_check
      _
    $region19: #{tpu_custom_call.1} parent=1 // pred_check_branch
      %51 = sbr.rel (0) target = $region21
    $region20: #{tpu_custom_call.1} parent=1 // pred_region
      %52 = dma.done [#allocation6], 512
    $region21: #{tpu_custom_call.1} parent=1 // pred_fallthru
      _
    // Predicated region
    $region22: #{tpu_custom_call.1} parent=1 // pred_check
      _
    $region23: #{tpu_custom_call.1} parent=1 // pred_check_branch
      %54 = sbr.rel (0) target = $region25
    $region24: #{tpu_custom_call.1} parent=1 // pred_region
      %55 = dma.done [#allocation6], 512
    $region25: #{tpu_custom_call.1} parent=1 // pred_fallthru
      _
    %v56 = vld [vmem:[#allocation2] sm:$0xff]
    %v57 = vld [vmem:[#allocation2 + $0x8] sm:$0xff]
    %v58 = vld [vmem:[#allocation2 + $0x10] sm:$0xff]
    %v59 = vld [vmem:[#allocation2 + $0x18] sm:$0xff]
    %v60 = vmul.f32 %v56, 0.17677669
    %v61 = vmul.f32 %v57, 0.17677669
    %v62 = vmul.f32 %v58, 0.17677669
    %v63 = vmul.f32 %v59, 0.17677669
    %v64 = vld [vmem:[#allocation5] sm:$0xff]
    %v65 = vld [vmem:[#allocation5 + $0x8] sm:$0xff]
    %v66 = vld [vmem:[#allocation5 + $0x10] sm:$0xff]
    %v67 = vld [vmem:[#allocation5 + $0x18] sm:$0xff]
    %v68 = vld [vmem:[#allocation7] sm:$0xff]
    %v69 = vld [vmem:[#allocation7 + $0x8] sm:$0xff]
    %v70 = vld [vmem:[#allocation7 + $0x10] sm:$0xff]
    %v71 = vld [vmem:[#allocation7 + $0x18] sm:$0xff]
    %vm72 = vcmask 261120
    %v74 = vsel %vm72, %v60, 0
    %v77 = vsel %vm72, %v61, 0
    %v80 = vsel %vm72, %v62, 0
    %v83 = vsel %vm72, %v63, 0
    %v86 = vsel %vm72, %v64, 0
    %v89 = vsel %vm72, %v65, 0
    %v92 = vsel %vm72, %v66, 0
    %v95 = vsel %vm72, %v67, 0
    %97 = vmatprep.subr.mxu0 0.0
    %98 = vmatpush1.xpose.msra.mxu0 0.0
    %99 = vmatprep.subr.mxu0 0.0
    %100 = vmatpush1.xpose.msra.mxu0 0.0
    %101 = vmatprep.subr.mxu0 0.0
    %102 = vmatpush1.xpose.msra.mxu0 0.0
    %103 = vmatprep.subr.mxu0 0.0
    %104 = vmatpush1.xpose.msra.mxu0 0.0
    %105 = vmatprep.subr.mxu0 0.0
    %106 = vmatpush1.xpose.msra.mxu0 0.0
    %107 = vmatprep.subr.mxu0 0.0
    %108 = vmatpush1.xpose.msra.mxu0 0.0
    %109 = vmatprep.subr.mxu0 0.0
    %110 = vmatpush1.xpose.msra.mxu0 0.0
    %111 = vmatprep.subr.mxu0 0.0
    %112 = vmatpush1.xpose.msra.mxu0 0.0
    %113 = vmatprep.subr.mxu0 0.0
    %114 = vmatpush1.xpose.msra.mxu0 0.0
    %115 = vmatprep.subr.mxu0 0.0
    %116 = vmatpush1.xpose.msra.mxu0 0.0
    %117 = vmatprep.subr.mxu0 0.0
    %118 = vmatpush1.xpose.msra.mxu0 0.0
    %119 = vmatprep.subr.mxu0 0.0
    %120 = vmatpush1.xpose.msra.mxu0 0.0
    %121 = vmatprep.subr.mxu0 0.0
    %122 = vmatpush1.xpose.msra.mxu0 %v95
    %123 = vmatprep.subr.mxu0 0.0
    %124 = vmatpush1.xpose.msra.mxu0 %v92
    %125 = vmatprep.subr.mxu0 0.0
    %126 = vmatpush1.xpose.msra.mxu0 %v89
    %127 = vmatprep.subr.mxu0 0.0
    %128 = vmatpush1.xpose.msra.mxu0 %v86
    %129 = vmatprep.subr.mxu0 0.0
    %130 = vmatpush2.xpose.msra.mxu0 0.0
    %131 = vmatprep.subr.mxu0 0.0
    %132 = vmatpush2.xpose.msra.mxu0 0.0
    %133 = vmatprep.subr.mxu0 0.0
    %134 = vmatpush2.xpose.msra.mxu0 0.0
    %135 = vmatprep.subr.mxu0 0.0
    %136 = vmatpush2.xpose.msra.mxu0 0.0
    %137 = vmatprep.subr.mxu0 0.0
    %138 = vmatpush2.xpose.msra.mxu0 0.0
    %139 = vmatprep.subr.mxu0 0.0
    %140 = vmatpush2.xpose.msra.mxu0 0.0
    %141 = vmatprep.subr.mxu0 0.0
    %142 = vmatpush2.xpose.msra.mxu0 0.0
    %143 = vmatprep.subr.mxu0 0.0
    %144 = vmatpush2.xpose.msra.mxu0 0.0
    %145 = vmatprep.subr.mxu0 0.0
    %146 = vmatpush2.xpose.msra.mxu0 0.0
    %147 = vmatprep.subr.mxu0 0.0
    %148 = vmatpush2.xpose.msra.mxu0 0.0
    %149 = vmatprep.subr.mxu0 0.0
    %150 = vmatpush2.xpose.msra.mxu0 0.0
    %151 = vmatprep.subr.mxu0 0.0
    %152 = vmatpush2.xpose.msra.mxu0 0.0
    %153 = vmatprep.subr.mxu0 0.0
    %154 = vmatpush2.xpose.msra.mxu0 0.0
    %155 = vmatprep.subr.mxu0 0.0
    %156 = vmatpush2.xpose.msra.mxu0 0.0
    %157 = vmatprep.subr.mxu0 0.0
    %158 = vmatpush2.xpose.msra.mxu0 0.0
    %159 = vmatprep.subr.mxu0 0.0
    %160 = vmatpush2.xpose.msra.mxu0 0.0
    %161 = vmatprep.mubr.f32.mxu0 0.0
    %162 = vmatmul.mubr.f32.gmra.mxu0 %v74
    %v163 = vpop.f32.mrf.mxu0
    %v164 = vadd.f32 0.0, %v163
    %v165 = vpop.f32.mrf.mxu0
    %166 = vmatprep.mubr.f32.mxu0 0.0
    %167 = vmatmul.mubr.f32.gmra.mxu0 %v77
    %v168 = vpop.f32.mrf.mxu0
    %v169 = vadd.f32 0.0, %v168
    %v170 = vpop.f32.mrf.mxu0
    %171 = vmatprep.mubr.f32.mxu0 0.0
    %172 = vmatmul.mubr.f32.gmra.mxu0 %v80
    %v173 = vpop.f32.mrf.mxu0
    %v174 = vadd.f32 0.0, %v173
    %v175 = vpop.f32.mrf.mxu0
    %176 = vmatprep.mubr.f32.mxu0 0.0
    %177 = vmatmul.mubr.f32.gmra.mxu0 %v83
    %v178 = vpop.f32.mrf.mxu0
    %v179 = vadd.f32 0.0, %v178
    %v180 = vpop.f32.mrf.mxu0
    %181 = vdwg.mxu0
    %vm182 = vcmask 130048
    %v183 = vsel %vm182, %v164, -inf
    %184 = vmax.xlane.f32.xlu0 %v183
    %v185 = vpop.xlane.xlu0 %184
    %v186 = vsel %vm182, %v169, -inf
    %187 = vmax.xlane.f32.xlu0 %v186
    %v188 = vpop.xlane.xlu0 %187
    %v189 = vsel %vm182, %v174, -inf
    %190 = vmax.xlane.f32.xlu0 %v189
    %v191 = vpop.xlane.xlu0 %190
    %v192 = vsel %vm182, %v179, -inf
    %193 = vmax.xlane.f32.xlu0 %v192
    %v194 = vpop.xlane.xlu0 %193
    %v195 = vsub.f32 %v164, %v185
    %v196 = vsub.f32 %v169, %v188
    %v197 = vsub.f32 %v174, %v191
    %v198 = vsub.f32 %v179, %v194
    %v199 = vmul.f32 %v195, 1.442695
    %v200 = vpow.pop %v199
    %v201 = vmul.f32 %v196, 1.442695
    %v202 = vpow.pop %v201
    %v203 = vmul.f32 %v197, 1.442695
    %v204 = vpow.pop %v203
    %v205 = vmul.f32 %v198, 1.442695
    %v206 = vpow.pop %v205
    %v207 = vsel %vm182, %v200, 0.0
    %208 = vadd.xlane.f32.xlu0 %v207
    %v209 = vpop.xlane.xlu0 %208
    %v210 = vsel %vm182, %v202, 0.0
    %211 = vadd.xlane.f32.xlu0 %v210
    %v212 = vpop.xlane.xlu0 %211
    %v213 = vsel %vm182, %v204, 0.0
    %214 = vadd.xlane.f32.xlu0 %v213
    %v215 = vpop.xlane.xlu0 %214
    %v216 = vsel %vm182, %v206, 0.0
    %217 = vadd.xlane.f32.xlu0 %v216
    %v218 = vpop.xlane.xlu0 %217
    %v219 = vrcp.pop %v209
    %v220 = vrcp.pop %v212
    %v221 = vrcp.pop %v215
    %v222 = vrcp.pop %v218
    %v223 = vmul.f32 %v209, %v219
    %v224 = vmul.f32 %v212, %v220
    %v225 = vmul.f32 %v215, %v221
    %v226 = vmul.f32 %v218, %v222
    %v227 = vsub.f32 2.0, %v223
    %v228 = vsub.f32 2.0, %v224
    %v229 = vsub.f32 2.0, %v225
    %v230 = vsub.f32 2.0, %v226
    %v231 = vmul.f32 %v219, %v227
    %v232 = vmul.f32 %v220, %v228
    %v233 = vmul.f32 %v221, %v229
    %v234 = vmul.f32 %v222, %v230
    %v235 = vmul.f32 %v200, %v231
    %v236 = vmul.f32 %v202, %v232
    %v237 = vmul.f32 %v204, %v233
    %v238 = vmul.f32 %v206, %v234
    %v240 = vsel %vm182, %v235, 0
    %v243 = vsel %vm182, %v236, 0
    %v246 = vsel %vm182, %v237, 0
    %v249 = vsel %vm182, %v238, 0
    %251 = vmatprep.subr.mxu0 0.0
    %252 = vmatpush1.msra.mxu0 0.0
    %253 = vmatprep.subr.mxu0 0.0
    %254 = vmatpush1.msra.mxu0 0.0
    %255 = vmatprep.subr.mxu0 0.0
    %256 = vmatpush1.msra.mxu0 0.0
    %257 = vmatprep.subr.mxu0 0.0
    %258 = vmatpush1.msra.mxu0 0.0
    %259 = vmatprep.subr.mxu0 0.0
    %260 = vmatpush1.msra.mxu0 0.0
    %261 = vmatprep.subr.mxu0 0.0
    %262 = vmatpush1.msra.mxu0 0.0
    %263 = vmatprep.subr.mxu0 0.0
    %264 = vmatpush1.msra.mxu0 0.0
    %265 = vmatprep.subr.mxu0 0.0
    %266 = vmatpush1.msra.mxu0 0.0
    %267 = vmatprep.subr.mxu0 0.0
    %268 = vmatpush1.msra.mxu0 0.0
    %269 = vmatprep.subr.mxu0 0.0
    %270 = vmatpush1.msra.mxu0 0.0
    %271 = vmatprep.subr.mxu0 0.0
    %272 = vmatpush1.msra.mxu0 0.0
    %273 = vmatprep.subr.mxu0 0.0
    %274 = vmatpush1.msra.mxu0 0.0
    %275 = vmatprep.subr.mxu0 0.0
    %276 = vmatpush1.msra.mxu0 0.0
    %277 = vmatprep.subr.mxu0 0.0
    %278 = vmatpush1.msra.mxu0 0.0
    %279 = vmatprep.subr.mxu0 0.0
    %280 = vmatpush1.msra.mxu0 %v69
    %281 = vmatprep.subr.mxu0 0.0
    %282 = vmatpush1.msra.mxu0 %v68
    %283 = vmatprep.subr.mxu0 0.0
    %284 = vmatpush2.msra.mxu0 0.0
    %285 = vmatprep.subr.mxu0 0.0
    %286 = vmatpush2.msra.mxu0 0.0
    %287 = vmatprep.subr.mxu0 0.0
    %288 = vmatpush2.msra.mxu0 0.0
    %289 = vmatprep.subr.mxu0 0.0
    %290 = vmatpush2.msra.mxu0 0.0
    %291 = vmatprep.subr.mxu0 0.0
    %292 = vmatpush2.msra.mxu0 0.0
    %293 = vmatprep.subr.mxu0 0.0
    %294 = vmatpush2.msra.mxu0 0.0
    %295 = vmatprep.subr.mxu0 0.0
    %296 = vmatpush2.msra.mxu0 0.0
    %297 = vmatprep.subr.mxu0 0.0
    %298 = vmatpush2.msra.mxu0 0.0
    %299 = vmatprep.subr.mxu0 0.0
    %300 = vmatpush2.msra.mxu0 0.0
    %301 = vmatprep.subr.mxu0 0.0
    %302 = vmatpush2.msra.mxu0 0.0
    %303 = vmatprep.subr.mxu0 0.0
    %304 = vmatpush2.msra.mxu0 0.0
    %305 = vmatprep.subr.mxu0 0.0
    %306 = vmatpush2.msra.mxu0 0.0
    %307 = vmatprep.subr.mxu0 0.0
    %308 = vmatpush2.msra.mxu0 0.0
    %309 = vmatprep.subr.mxu0 0.0
    %310 = vmatpush2.msra.mxu0 0.0
    %311 = vmatprep.subr.mxu0 0.0
    %312 = vmatpush2.msra.mxu0 0.0
    %313 = vmatprep.subr.mxu0 0.0
    %314 = vmatpush2.msra.mxu0 0.0
    %315 = vmatprep.mubr.f32.mxu0 0.0
    %316 = vmatmul.mubr.f32.gmra.mxu0 %v240
    %v317 = vpop.f32.mrf.mxu0
    %v318 = vadd.f32 0.0, %v317
    %v319 = vpop.f32.mrf.mxu0
    %320 = vmatprep.mubr.f32.mxu0 0.0
    %321 = vmatmul.mubr.f32.gmra.mxu0 %v243
    %v322 = vpop.f32.mrf.mxu0
    %v323 = vadd.f32 0.0, %v322
    %v324 = vpop.f32.mrf.mxu0
    %325 = vmatprep.mubr.f32.mxu0 0.0
    %326 = vmatmul.mubr.f32.gmra.mxu0 %v246
    %v327 = vpop.f32.mrf.mxu0
    %v328 = vadd.f32 0.0, %v327
    %v329 = vpop.f32.mrf.mxu0
    %330 = vmatprep.mubr.f32.mxu0 0.0
    %331 = vmatmul.mubr.f32.gmra.mxu0 %v249
    %v332 = vpop.f32.mrf.mxu0
    %v333 = vadd.f32 0.0, %v332
    %v334 = vpop.f32.mrf.mxu0
    %335 = vdwg.mxu0
    %vm336 = vcmask 261248
    %v337 = vsel %vm336, %v164, -inf
    %338 = vmax.xlane.f32.xlu0 %v337
    %v339 = vpop.xlane.xlu0 %338
    %v340 = vsel %vm336, %v169, -inf
    %341 = vmax.xlane.f32.xlu0 %v340
    %v342 = vpop.xlane.xlu0 %341
    %v343 = vsel %vm336, %v174, -inf
    %344 = vmax.xlane.f32.xlu0 %v343
    %v345 = vpop.xlane.xlu0 %344
    %v346 = vsel %vm336, %v179, -inf
    %347 = vmax.xlane.f32.xlu0 %v346
    %v348 = vpop.xlane.xlu0 %347
    %v349 = vsub.f32 %v164, %v339
    %v350 = vsub.f32 %v169, %v342
    %v351 = vsub.f32 %v174, %v345
    %v352 = vsub.f32 %v179, %v348
    %v353 = vmul.f32 %v349, 1.442695
    %v354 = vpow.pop %v353
    %v355 = vmul.f32 %v350, 1.442695
    %v356 = vpow.pop %v355
    %v357 = vmul.f32 %v351, 1.442695
    %v358 = vpow.pop %v357
    %v359 = vmul.f32 %v352, 1.442695
    %v360 = vpow.pop %v359
    %365 = vrot.lane.b32.xlu0 %v354, 112
    %v366 = vpop.permute.xlu0 %365
    %367 = vrot.lane.b32.xlu0 %v356, 112
    %v368 = vpop.permute.xlu0 %367
    %369 = vrot.lane.b32.xlu0 %v358, 112
    %v370 = vpop.permute.xlu0 %369
    %371 = vrot.lane.b32.xlu0 %v360, 112
    %v372 = vpop.permute.xlu0 %371
    %v377 = vsel %vm182, %v366, 0.0
    %378 = vadd.xlane.f32.xlu0 %v377
    %v379 = vpop.xlane.xlu0 %378
    %v380 = vsel %vm182, %v368, 0.0
    %381 = vadd.xlane.f32.xlu0 %v380
    %v382 = vpop.xlane.xlu0 %381
    %v383 = vsel %vm182, %v370, 0.0
    %384 = vadd.xlane.f32.xlu0 %v383
    %v385 = vpop.xlane.xlu0 %384
    %v386 = vsel %vm182, %v372, 0.0
    %387 = vadd.xlane.f32.xlu0 %v386
    %v388 = vpop.xlane.xlu0 %387
    %v389 = vrcp.pop %v379
    %v390 = vrcp.pop %v382
    %v391 = vrcp.pop %v385
    %v392 = vrcp.pop %v388
    %v393 = vmul.f32 %v379, %v389
    %v394 = vmul.f32 %v382, %v390
    %v395 = vmul.f32 %v385, %v391
    %v396 = vmul.f32 %v388, %v392
    %v397 = vsub.f32 2.0, %v393
    %v398 = vsub.f32 2.0, %v394
    %v399 = vsub.f32 2.0, %v395
    %v400 = vsub.f32 2.0, %v396
    %v401 = vmul.f32 %v389, %v397
    %v402 = vmul.f32 %v390, %v398
    %v403 = vmul.f32 %v391, %v399
    %v404 = vmul.f32 %v392, %v400
    %v405 = vmul.f32 %v354, %v401
    %v406 = vmul.f32 %v356, %v402
    %v407 = vmul.f32 %v358, %v403
    %v408 = vmul.f32 %v360, %v404
    %413 = vrot.lane.b32.xlu0 %v405, 112
    %v414 = vpop.permute.xlu0 %413
    %415 = vrot.lane.b32.xlu0 %v406, 112
    %v416 = vpop.permute.xlu0 %415
    %417 = vrot.lane.b32.xlu0 %v407, 112
    %v418 = vpop.permute.xlu0 %417
    %419 = vrot.lane.b32.xlu0 %v408, 112
    %v420 = vpop.permute.xlu0 %419
    %v421 = vsel %vm182, %v414, 0
    %v423 = vsel %vm182, %v416, 0
    %v425 = vsel %vm182, %v418, 0
    %v427 = vsel %vm182, %v420, 0
    %429 = vmatprep.subr.mxu0 0.0
    %430 = vmatpush1.msra.mxu0 0.0
    %431 = vmatprep.subr.mxu0 0.0
    %432 = vmatpush1.msra.mxu0 0.0
    %433 = vmatprep.subr.mxu0 0.0
    %434 = vmatpush1.msra.mxu0 0.0
    %435 = vmatprep.subr.mxu0 0.0
    %436 = vmatpush1.msra.mxu0 0.0
    %437 = vmatprep.subr.mxu0 0.0
    %438 = vmatpush1.msra.mxu0 0.0
    %439 = vmatprep.subr.mxu0 0.0
    %440 = vmatpush1.msra.mxu0 0.0
    %441 = vmatprep.subr.mxu0 0.0
    %442 = vmatpush1.msra.mxu0 0.0
    %443 = vmatprep.subr.mxu0 0.0
    %444 = vmatpush1.msra.mxu0 0.0
    %445 = vmatprep.subr.mxu0 0.0
    %446 = vmatpush1.msra.mxu0 0.0
    %447 = vmatprep.subr.mxu0 0.0
    %448 = vmatpush1.msra.mxu0 0.0
    %449 = vmatprep.subr.mxu0 0.0
    %450 = vmatpush1.msra.mxu0 0.0
    %451 = vmatprep.subr.mxu0 0.0
    %452 = vmatpush1.msra.mxu0 0.0
    %453 = vmatprep.subr.mxu0 0.0
    %454 = vmatpush1.msra.mxu0 0.0
    %455 = vmatprep.subr.mxu0 0.0
    %456 = vmatpush1.msra.mxu0 0.0
    %457 = vmatprep.subr.mxu0 0.0
    %458 = vmatpush1.msra.mxu0 %v71
    %459 = vmatprep.subr.mxu0 0.0
    %460 = vmatpush1.msra.mxu0 %v70
    %461 = vmatprep.subr.mxu0 0.0
    %462 = vmatpush2.msra.mxu0 0.0
    %463 = vmatprep.subr.mxu0 0.0
    %464 = vmatpush2.msra.mxu0 0.0
    %465 = vmatprep.subr.mxu0 0.0
    %466 = vmatpush2.msra.mxu0 0.0
    %467 = vmatprep.subr.mxu0 0.0
    %468 = vmatpush2.msra.mxu0 0.0
    %469 = vmatprep.subr.mxu0 0.0
    %470 = vmatpush2.msra.mxu0 0.0
    %471 = vmatprep.subr.mxu0 0.0
    %472 = vmatpush2.msra.mxu0 0.0
    %473 = vmatprep.subr.mxu0 0.0
    %474 = vmatpush2.msra.mxu0 0.0
    %475 = vmatprep.subr.mxu0 0.0
    %476 = vmatpush2.msra.mxu0 0.0
    %477 = vmatprep.subr.mxu0 0.0
    %478 = vmatpush2.msra.mxu0 0.0
    %479 = vmatprep.subr.mxu0 0.0
    %480 = vmatpush2.msra.mxu0 0.0
    %481 = vmatprep.subr.mxu0 0.0
    %482 = vmatpush2.msra.mxu0 0.0
    %483 = vmatprep.subr.mxu0 0.0
    %484 = vmatpush2.msra.mxu0 0.0
    %485 = vmatprep.subr.mxu0 0.0
    %486 = vmatpush2.msra.mxu0 0.0
    %487 = vmatprep.subr.mxu0 0.0
    %488 = vmatpush2.msra.mxu0 0.0
    %489 = vmatprep.subr.mxu0 0.0
    %490 = vmatpush2.msra.mxu0 0.0
    %491 = vmatprep.subr.mxu0 0.0
    %492 = vmatpush2.msra.mxu0 0.0
    %493 = vmatprep.mubr.f32.mxu0 0.0
    %494 = vmatmul.mubr.f32.gmra.mxu0 %v421
    %v495 = vpop.f32.mrf.mxu0
    %v496 = vadd.f32 0.0, %v495
    %v497 = vpop.f32.mrf.mxu0
    %498 = vmatprep.mubr.f32.mxu0 0.0
    %499 = vmatmul.mubr.f32.gmra.mxu0 %v423
    %v500 = vpop.f32.mrf.mxu0
    %v501 = vadd.f32 0.0, %v500
    %v502 = vpop.f32.mrf.mxu0
    %503 = vmatprep.mubr.f32.mxu0 0.0
    %504 = vmatmul.mubr.f32.gmra.mxu0 %v425
    %v505 = vpop.f32.mrf.mxu0
    %v506 = vadd.f32 0.0, %v505
    %v507 = vpop.f32.mrf.mxu0
    %508 = vmatprep.mubr.f32.mxu0 0.0
    %509 = vmatmul.mubr.f32.gmra.mxu0 %v427
    %v510 = vpop.f32.mrf.mxu0
    %v511 = vadd.f32 0.0, %v510
    %v512 = vpop.f32.mrf.mxu0
    %513 = vdwg.mxu0
    %518 = vrot.lane.b32.xlu0 %v496, 32
    %v519 = vpop.permute.xlu0 %518
    %520 = vrot.lane.b32.xlu0 %v501, 32
    %v521 = vpop.permute.xlu0 %520
    %522 = vrot.lane.b32.xlu0 %v506, 32
    %v523 = vpop.permute.xlu0 %522
    %524 = vrot.lane.b32.xlu0 %v511, 32
    %v525 = vpop.permute.xlu0 %524
    %530 = vrot.lane.b32.xlu0 %v235, 64
    %v531 = vpop.permute.xlu0 %530
    %532 = vrot.lane.b32.xlu0 %v236, 64
    %v533 = vpop.permute.xlu0 %532
    %534 = vrot.lane.b32.xlu0 %v237, 64
    %v535 = vpop.permute.xlu0 %534
    %536 = vrot.lane.b32.xlu0 %v238, 64
    %v537 = vpop.permute.xlu0 %536
    %542 = vrot.lane.b32.xlu0 %v405, 64
    %v543 = vpop.permute.xlu0 %542
    %544 = vrot.lane.b32.xlu0 %v406, 64
    %v545 = vpop.permute.xlu0 %544
    %546 = vrot.lane.b32.xlu0 %v407, 64
    %v547 = vpop.permute.xlu0 %546
    %548 = vrot.lane.b32.xlu0 %v408, 64
    %v549 = vpop.permute.xlu0 %548
    %v554 = vsel %vm72, %v318, %v519
    %v555 = vsel %vm72, %v323, %v521
    %v556 = vsel %vm72, %v328, %v523
    %v557 = vsel %vm72, %v333, %v525
    %vm558 = vcmask 523264
    %v559 = vsel %vm558, %v554, %v531
    %v560 = vsel %vm558, %v555, %v533
    %v561 = vsel %vm558, %v556, %v535
    %v562 = vsel %vm558, %v557, %v537
    %vm563 = vcmask 654336
    %v564 = vsel %vm563, %v559, %v543
    %v565 = vsel %vm563, %v560, %v545
    %v566 = vsel %vm563, %v561, %v547
    %v567 = vsel %vm563, %v562, %v549
    %vm568 = vcmask 785408
    %569 = vst.msk [vmem:[#allocation8] sm:$0xff] %vm568, %v564
    %570 = vst.msk [vmem:[#allocation8 + $0x8] sm:$0xff] %vm568, %v565
    %571 = vst.msk [vmem:[#allocation8 + $0x10] sm:$0xff] %vm568, %v566
    %572 = vst.msk [vmem:[#allocation8 + $0x18] sm:$0xff] %vm568, %v567
    // Predicated region
    $region26: #{tpu_custom_call.1} parent=1 // pred_check
      _
    $region27: #{tpu_custom_call.1} parent=1 // pred_check_branch
      %574 = sbr.rel (0) target = $region29
    $region28: #{tpu_custom_call.1} parent=1 // pred_region
      %s576 = ssub.s32 512, 512
      %577 = vsyncadd [#allocation4], %s576
      %s578 = sshll.u32 [#allocation8], 4
      %s579 = int_to_ptr.vmem [resolvable:$true] %s578
      %584 = dma.vmem_to_hbm [thread:$0]  %s579, 512, %s3, [#allocation4], 128, 128, 8
    $region29: #{tpu_custom_call.1} parent=1 // pred_fallthru
      _
    // Predicated region
    $region30: #{tpu_custom_call.1} parent=1 // pred_check
      _
    $region31: #{tpu_custom_call.1} parent=1 // pred_check_branch
      %586 = sbr.rel (0) target = $region33
    $region32: #{tpu_custom_call.1} parent=1 // pred_region
      %587 = dma.done [#allocation4], 512
    $region33: #{tpu_custom_call.1} parent=1 // pred_fallthru
      _
    %588 = vsyncpa [#allocation3], 1
    %589 = vsyncpa [#allocation6], 1
    %590 = vsyncpa [#allocation4], 1

</llo_original>
